<compile_context>
chip_gen: v6e
topology: v6e:2x2x1
jax: 0.10.0
libtpu: 0.0.40
codegen_flags: <defaults>
</compile_context>

<pallas_src>
import jax
import jax.numpy as jnp
from jax.experimental import pallas as pl
from jax.experimental.pallas import tpu as pltpu


def _round_up(x, mult):
    return (x + mult - 1) // mult * mult


# ---------------------------------------------------------------------------
# Fused kernel: gather h (once) -> per-vocab-tile matmul + log-softmax(dim=0)
# ---------------------------------------------------------------------------
def _make_w2v_kernel(m, table_in_vmem, window):
    def kernel(ids_ref, wa_hbm, ba_ref, wb_ref, bb_ref, out_ref, *scratch):
        if table_in_vmem:
            h32_ref, h_ref, tbl_ref, sem = scratch
        else:
            h32_ref, h_ref, sems = scratch

        # ---- one-time gather of embedding rows into persistent scratch -----
        @pl.when(pl.program_id(0) == 0)
        def _gather():
            if table_in_vmem:
                # Single streaming DMA of the whole (V, E) table, then cheap
                # in-VMEM dynamic-slice row copies (no per-row DMA descriptors).
                cp = pltpu.make_async_copy(wa_hbm, tbl_ref, sem)
                cp.start()
                cp.wait()

                @pl.loop(0, m)
                def _(i):
                    h32_ref[pl.ds(i, 1), :] = tbl_ref[pl.ds(ids_ref[i], 1), :]
            else:
                # Table too large for VMEM: per-row HBM DMA gather with a
                # bounded in-flight window (no all-at-once descriptor burst).
                def row_copy(i, slot):
                    return pltpu.make_async_copy(
                        wa_hbm.at[pl.ds(ids_ref[i], 1), :],
                        h32_ref.at[pl.ds(i, 1), :],
                        sems.at[slot])

                @pl.loop(0, min(window, m))
                def _prime(i):
                    row_copy(i, i).start()

                @pl.loop(0, m)
                def _drain(i):
                    slot = i & (window - 1)
                    row_copy(i, slot).wait()

                    @pl.when(i + window < m)
                    def _():
                        row_copy(i + window, slot).start()

            # Vectorized bias add in f32, cast once to the MXU compute dtype.
            h_ref[...] = (h32_ref[...] + ba_ref[...]).astype(h_ref.dtype)

        # ---- per-vocab-tile: logits = h @ wb_tile.T + bb_tile ---------------
        logits = jax.lax.dot_general(
            h_ref[...], wb_ref[...],
            dimension_numbers=(((1,), (1,)), ((), ())),   # contract on E
            preferred_element_type=jnp.float32,
        ) + bb_ref[...]

        # LogSoftmax over dim=0 (flattened-token axis), matching
        # torch.nn.LogSoftmax(dim=0): every vocab column is independent, so a
        # vocab tile needs no cross-tile reduction.  All math stays f32.
        col_max = jnp.max(logits, axis=0, keepdims=True)
        z = logits - col_max
        lse = jnp.log(jnp.sum(jnp.exp(z), axis=0, keepdims=True))
        out_ref[...] = (z - lse).astype(out_ref.dtype)

    return kernel


# ---------------------------------------------------------------------------
# VMEM planning
# ---------------------------------------------------------------------------
def _vmem_capacity_bytes():
    try:
        return int(pltpu.get_tpu_info().vmem_capacity_bytes)
    except Exception:
        return 64 * 1024 * 1024          # conservative: v7x per-core VMEM


def _pick_vocab_tile(v_pad, m, emb, fixed_bytes, wb_itemsize, out_itemsize,
                     budget_bytes):
    """Largest 128-multiple vocab tile whose double-buffered pipelined tiles
    (wb, bb, out) fit the remaining budget.  h / the table are fixed scratch
    and counted once (not per tile)."""
    per_col = 2 * (emb * wb_itemsize + 4 + m * out_itemsize)
    avail = budget_bytes - fixed_bytes - 2 * emb * 4     # minus tiny ba buffers
    if per_col <= 0 or avail < per_col * 128:
        return 128
    tn = (avail // per_col) // 128 * 128
    return int(max(128, min(tn, 4096, v_pad)))


# ---------------------------------------------------------------------------
# Parameter preparation (one-time relayout/pad/cast; hoisted out of forward)
# ---------------------------------------------------------------------------
def prepare_word2vec_params(wa, ba, wb, bb, *, compute_dtype=jnp.bfloat16):
    """wa: (E, V) layer_A.weight, ba: (E,), wb: (V, E) layer_B.weight, bb: (V,)."""
    emb, voc = wa.shape
    assert wb.shape == (voc, emb) and ba.shape == (emb,) and bb.shape == (voc,)
    v_pad = _round_up(voc, 128)                 # lane-dense, tile-size agnostic
    return dict(
        voc=voc, emb=emb, v_pad=v_pad, compute_dtype=compute_dtype,
        wa_rows=jnp.asarray(wa, jnp.float32).T,                       # (V, E)
        ba=jnp.asarray(ba, jnp.float32).reshape(1, emb),              # (1, E)
        wb_p=jnp.pad(jnp.asarray(wb, compute_dtype),
                     ((0, v_pad - voc), (0, 0))),                     # (Vp, E)
        bb_p=jnp.pad(jnp.asarray(bb, jnp.float32),
                     (0, v_pad - voc)).reshape(1, v_pad),             # (1, Vp)
    )


# ---------------------------------------------------------------------------
# Forward pass
# ---------------------------------------------------------------------------
def word2vec_forward(params, token_ids, *, out_dtype=jnp.float32,
                     gather_window=8):
    """Returns log-probs of shape (N*lng, V); log-softmax over axis 0."""
    assert gather_window & (gather_window - 1) == 0, "window must be pow2"
    voc, emb, v_pad = params["voc"], params["emb"], params["v_pad"]
    cdt = params["compute_dtype"]
    cdt_isz = jnp.dtype(cdt).itemsize
    out_isz = jnp.dtype(out_dtype).itemsize

    n, lng = token_ids.shape
    m = n * lng
    ids = token_ids.reshape(-1).astype(jnp.int32)

    # Per-generation VMEM plan: large tiles on 128 MiB parts (v5e/v6e),
    # conservative plan on 64 MiB v7x.
    vmem_cap = _vmem_capacity_bytes()
    budget = min(vmem_cap // 2, 64 * 1024 * 1024)
    vmem_limit = int(min(vmem_cap * 3 // 4, 112 * 1024 * 1024))

    table_bytes = voc * emb * 4
    table_in_vmem = table_bytes <= min(16 * 1024 * 1024, budget // 3)

    fixed = m * emb * 4 + m * emb * cdt_isz          # h32 + h scratch (resident)
    if table_in_vmem:
        fixed += table_bytes

    tn = _pick_vocab_tile(v_pad, m, emb, fixed, cdt_isz, out_isz, budget)
    num_tiles = (v_pad + tn - 1) // tn               # ragged last tile allowed

    scratch_shapes = [pltpu.VMEM((m, emb), jnp.float32),   # gathered rows (f32)
                      pltpu.VMEM((m, emb), cdt)]           # h in MXU dtype
    if table_in_vmem:
        scratch_shapes += [pltpu.VMEM((voc, emb), jnp.float32),
                           pltpu.SemaphoreType.DMA(())]
    else:
        scratch_shapes += [pltpu.SemaphoreType.DMA((gather_window,))]

    kernel = _make_w2v_kernel(m, table_in_vmem, gather_window)

    gather_bytes = table_bytes if table_in_vmem else m * emb * 4
    out_padded = pl.pallas_call(
        kernel,
        grid_spec=pltpu.PrefetchScalarGridSpec(
            num_scalar_prefetch=1,                         # token ids -> SMEM
            grid=(num_tiles,),
            in_specs=[
                pl.BlockSpec(memory_space=pl.ANY),                  # (V,E) table
                pl.BlockSpec((1, emb), lambda j, _ids: (0, 0)),     # ba
                pl.BlockSpec((tn, emb), lambda j, _ids: (j, 0)),    # wb tile
                pl.BlockSpec((1, tn), lambda j, _ids: (0, j)),      # bb tile
            ],
            out_specs=pl.BlockSpec((m, tn), lambda j, _ids: (0, j)),
            scratch_shapes=scratch_shapes,
        ),
        out_shape=jax.ShapeDtypeStruct((m, v_pad), out_dtype),
        compiler_params=pltpu.CompilerParams(
            dimension_semantics=("arbitrary",),      # h scratch carried across tiles
            vmem_limit_bytes=vmem_limit),
        cost_estimate=pl.CostEstimate(
            flops=2 * m * emb * v_pad,
            transcendentals=m * v_pad,
            bytes_accessed=(gather_bytes
                            + v_pad * emb * cdt_isz      # wb (read once)
                            + v_pad * 4                  # bb
                            + m * v_pad * out_isz        # output writeback
                            + m * 4)),                   # ids
    )(ids, params["wa_rows"], params["ba"], params["wb_p"], params["bb_p"])

    return out_padded[:, :voc]


def _xavier_uniform(key, shape):
    # torch.nn.init.xavier_uniform_ on a (out_features, in_features) weight.
    fan_out, fan_in = shape
    bound = (6.0 / (fan_in + fan_out)) ** 0.5
    return jax.random.uniform(key, shape, jnp.float32, minval=-bound, maxval=bound)


if __name__ == "__main__":
    # Small shapes consistent with the module: vocab=32, embed=16, batch=2, seq=8.
    VOC, EMB = 32, 16
    N, LNG = 2, 8

    key = jax.random.PRNGKey(0)
    k_ids, k_wa, k_ba, k_wb, k_bb = jax.random.split(key, 5)

    token_ids = jax.random.randint(k_ids, (N, LNG), 0, VOC, dtype=jnp.int32)
    wa = _xavier_uniform(k_wa, (EMB, VOC))     # layer_A.weight (E, V)
    wb = _xavier_uniform(k_wb, (VOC, EMB))     # layer_B.weight (V, E)
    ba = jax.random.uniform(k_ba, (EMB,), jnp.float32,
                            minval=-1.0 / VOC ** 0.5, maxval=1.0 / VOC ** 0.5)
    bb = jax.random.uniform(k_bb, (VOC,), jnp.float32,
                            minval=-1.0 / EMB ** 0.5, maxval=1.0 / EMB ** 0.5)

    params = prepare_word2vec_params(wa, ba, wb, bb)
    out = word2vec_forward(params, token_ids)
    out = jax.block_until_ready(out)
    assert out.shape == (N * LNG, VOC)

    # Reference with matched numerics (bf16 MXU inputs, f32 accumulate/softmax).
    ids = token_ids.reshape(-1)
    h32 = wa.T[ids] + ba
    h16 = h32.astype(jnp.bfloat16)
    logits_ref = jax.lax.dot_general(
        h16, wb.astype(jnp.bfloat16),
        dimension_numbers=(((1,), (1,)), ((), ())),
        preferred_element_type=jnp.float32) + bb
    ref = jax.nn.log_softmax(logits_ref, axis=0)
    assert jnp.allclose(out, ref, atol=1e-3, rtol=1e-3), \
        float(jnp.max(jnp.abs(out - ref)))

    # Loose check against the pure-f32 PyTorch-equivalent forward (semantics).
    oh = jax.nn.one_hot(ids, VOC, dtype=jnp.float32)
    logits_f32 = (oh @ wa.T + ba) @ wb.T + bb
    ref_f32 = jax.nn.log_softmax(logits_f32, axis=0)
    assert jnp.allclose(out, ref_f32, atol=5e-2, rtol=5e-2)

    print("KERNEL_OK")
</pallas_src>

<mosaic_0001>
module attributes {stable_mosaic.version = 11 : i64} {
  func.func @kernel(%arg0: i32, %arg1: memref<16xi32, #tpu.memory_space<smem>>, %arg2: memref<32x16xf32, #tpu.memory_space<any>>, %arg3: memref<1x16xf32, #tpu.memory_space<vmem>>, %arg4: memref<128x16xbf16, #tpu.memory_space<vmem>>, %arg5: memref<1x128xf32, #tpu.memory_space<vmem>>, %arg6: memref<16x128xf32, #tpu.memory_space<vmem>>, %arg7: memref<16x16xf32, #tpu.memory_space<vmem>>, %arg8: memref<16x16xbf16, #tpu.memory_space<vmem>>, %arg9: memref<32x16xf32, #tpu.memory_space<vmem>>, %arg10: memref<!tpu.dma_semaphore, #tpu.memory_space<semaphore_mem>>) attributes {dimension_semantics = [#tpu.dimension_semantics<arbitrary>], iteration_bounds = array<i64: 1>, scalar_prefetch = 1 : i64, scratch_operands = 4 : i64, tpu.core_type = #tpu.core_type<tc>, window_params = [{}, {pipeline_mode = #tpu.pipeline_mode<synchronous>, transform_indices = @transform_1, window_bounds = array<i64: 1, 16>}, {transform_indices = @transform_2, window_bounds = array<i64: 128, 16>}, {transform_indices = @transform_3, window_bounds = array<i64: 1, 128>}, {transform_indices = @transform_4, window_bounds = array<i64: 16, 128>}]} {
    %c0_i32 = arith.constant 0 : i32
    %0 = arith.cmpi eq, %arg0, %c0_i32 : i32
    %1 = arith.extui %0 : i1 to i32
    %c0_i32_0 = arith.constant 0 : i32
    %2 = arith.cmpi ne, %1, %c0_i32_0 : i32
    scf.if %2 {
      tpu.enqueue_dma source(%arg2 : memref<32x16xf32, #tpu.memory_space<any>>) target(%arg9 : memref<32x16xf32, #tpu.memory_space<vmem>>) target_semaphore(%arg10 : memref<!tpu.dma_semaphore, #tpu.memory_space<semaphore_mem>>)
      tpu.wait_dma2 semaphore(%arg10 : memref<!tpu.dma_semaphore, #tpu.memory_space<semaphore_mem>>) src(%arg2 : memref<32x16xf32, #tpu.memory_space<any>>) dst(%arg9 : memref<32x16xf32, #tpu.memory_space<vmem>>)
      %c0_i32_10 = arith.constant 0 : i32
      %c16_i32 = arith.constant 16 : i32
      %20 = arith.addi %c0_i32_10, %c16_i32 : i32
      %c1_i32 = arith.constant 1 : i32
      scf.for %arg11 = %c0_i32_10 to %20 step %c1_i32  : i32 {
        %c1_i32_18 = arith.constant 1 : i32
        %27 = arith.muli %arg11, %c1_i32_18 : i32
        %c0_i32_19 = arith.constant 0 : i32
        %28 = arith.addi %c0_i32_19, %27 : i32
        %29 = arith.index_cast %28 : i32 to index
        %30 = memref.load %arg1[%29] : memref<16xi32, #tpu.memory_space<smem>>
        %31 = arith.index_cast %30 : i32 to index
        %c0_20 = arith.constant 0 : index
        %32 = vector.load %arg9[%31, %c0_20] : memref<32x16xf32, #tpu.memory_space<vmem>>, vector<1x16xf32>
        %33 = arith.index_cast %28 : i32 to index
        %c0_21 = arith.constant 0 : index
        %34 = vector.load %arg7[%33, %c0_21] : memref<16x16xf32, #tpu.memory_space<vmem>>, vector<1x16xf32>
        tpu.vector_store %arg7[%33, %c0_21], %32 {strides = array<i32>} : memref<16x16xf32, #tpu.memory_space<vmem>>, vector<1x16xf32>,
      }
      %c16_i32_11 = arith.constant 16 : i32
      %c0_12 = arith.constant 0 : index
      %c0_13 = arith.constant 0 : index
      %21 = vector.load %arg7[%c0_12, %c0_13] : memref<16x16xf32, #tpu.memory_space<vmem>>, vector<16x16xf32>
      %c0_14 = arith.constant 0 : index
      %c0_15 = arith.constant 0 : index
      %22 = vector.load %arg3[%c0_14, %c0_15] : memref<1x16xf32, #tpu.memory_space<vmem>>, vector<1x16xf32>
      %23 = vector.broadcast %22 : vector<1x16xf32> to vector<16x16xf32>
      %24 = arith.addf %21, %23 : vector<16x16xf32>
      %25 = arith.truncf %24 : vector<16x16xf32> to vector<16x16xbf16>
      %c0_16 = arith.constant 0 : index
      %c0_17 = arith.constant 0 : index
      %26 = vector.load %arg8[%c0_16, %c0_17] : memref<16x16xbf16, #tpu.memory_space<vmem>>, vector<16x16xbf16>
      tpu.vector_store %arg8[%c0_16, %c0_17], %25 {strides = array<i32>} : memref<16x16xbf16, #tpu.memory_space<vmem>>, vector<16x16xbf16>,
    } else {
    }
    %c0 = arith.constant 0 : index
    %c0_1 = arith.constant 0 : index
    %3 = vector.load %arg8[%c0, %c0_1] : memref<16x16xbf16, #tpu.memory_space<vmem>>, vector<16x16xbf16>
    %c0_2 = arith.constant 0 : index
    %c0_3 = arith.constant 0 : index
    %4 = vector.load %arg4[%c0_2, %c0_3] : memref<128x16xbf16, #tpu.memory_space<vmem>>, vector<128x16xbf16>
    %cst = arith.constant dense<0.000000e+00> : vector<16x128xf32>
    %5 = tpu.matmul %3, %4, %cst {dimension_numbers = #tpu.dot_dimension_numbers<[1], [1], [0], [0], [0, 0, 1, 0], [], []>} : vector<16x16xbf16>, vector<128x16xbf16>, vector<16x128xf32> -> vector<16x128xf32>
    %c0_4 = arith.constant 0 : index
    %c0_5 = arith.constant 0 : index
    %6 = vector.load %arg5[%c0_4, %c0_5] : memref<1x128xf32, #tpu.memory_space<vmem>>, vector<1x128xf32>
    %7 = vector.broadcast %6 : vector<1x128xf32> to vector<16x128xf32>
    %8 = arith.addf %5, %7 : vector<16x128xf32>
    %cst_6 = arith.constant dense<0xFF800000> : vector<128xf32>
    %9 = vector.multi_reduction <maximumf>, %8, %cst_6 [0] : vector<16x128xf32> to vector<128xf32>
    %10 = vector.shape_cast %9 : vector<128xf32> to vector<1x128xf32>
    %11 = vector.broadcast %10 : vector<1x128xf32> to vector<16x128xf32>
    %12 = arith.subf %8, %11 : vector<16x128xf32>
    %13 = math.exp %12 : vector<16x128xf32>
    %cst_7 = arith.constant dense<0.000000e+00> : vector<128xf32>
    %14 = vector.multi_reduction <add>, %13, %cst_7 [0] : vector<16x128xf32> to vector<128xf32>
    %15 = vector.shape_cast %14 : vector<128xf32> to vector<1x128xf32>
    %16 = math.log %15 : vector<1x128xf32>
    %17 = vector.broadcast %16 : vector<1x128xf32> to vector<16x128xf32>
    %18 = arith.subf %12, %17 : vector<16x128xf32>
    %c0_8 = arith.constant 0 : index
    %c0_9 = arith.constant 0 : index
    %19 = vector.load %arg6[%c0_8, %c0_9] : memref<16x128xf32, #tpu.memory_space<vmem>>, vector<16x128xf32>
    tpu.vector_store %arg6[%c0_8, %c0_9], %18 {strides = array<i32>} : memref<16x128xf32, #tpu.memory_space<vmem>>, vector<16x128xf32>,
    return
  }
  func.func @transform_1(%arg0: i32, %arg1: memref<16xi32, #tpu.memory_space<smem>>) -> (i32, i32) {
    %c0_i32 = arith.constant 0 : i32
    %c0_i32_0 = arith.constant 0 : i32
    %c0_i32_1 = arith.constant 0 : i32
    return %c0_i32, %c0_i32_0 : i32, i32
  }
  func.func @transform_2(%arg0: i32, %arg1: memref<16xi32, #tpu.memory_space<smem>>) -> (i32, i32) {
    %c0_i32 = arith.constant 0 : i32
    %c0_i32_0 = arith.constant 0 : i32
    return %arg0, %c0_i32 : i32, i32
  }
  func.func @transform_3(%arg0: i32, %arg1: memref<16xi32, #tpu.memory_space<smem>>) -> (i32, i32) {
    %c0_i32 = arith.constant 0 : i32
    %c0_i32_0 = arith.constant 0 : i32
    return %c0_i32, %arg0 : i32, i32
  }
  func.func @transform_4(%arg0: i32, %arg1: memref<16xi32, #tpu.memory_space<smem>>) -> (i32, i32) {
    %c0_i32 = arith.constant 0 : i32
    %c0_i32_0 = arith.constant 0 : i32
    return %c0_i32, %arg0 : i32, i32
  }
}

</mosaic_0001>

<llo_original>
// kernel: tpu_custom_call.1
$region0: #{tpu_custom_call.1}
  #allocation0 [shape = 'u32[]', space=smem, size = 0x4, offset = 0x4, fixed_abs, tag = 'smem constant byte address 0x4 - core index']
  #allocation1 [shape = 'u32[144,128]{1,0:T(1,128)}', space=vmem, size = 0x12000, scoped, tag = 'internal scratch']
  #allocation2 [shape = 'f32[16,16]{1,0:T(8,128)}', space=vmem, size = 0x2000, scoped, tag = 'scratch operand']
  #allocation3 [shape = 'bf16[16,16]{1,0:T(8,128)(2,1)}', space=vmem, size = 0x1000, scoped, tag = 'scratch operand']
  #allocation4 [shape = 'f32[32,16]{1,0:T(8,128)}', space=vmem, size = 0x4000, scoped, tag = 'scratch operand']
  #allocation5 [shape = 's32[1]{0}', space=sflag, size = 0x4, scoped, tag = 'scratch operand']
  #allocation6 [shape = 's32[1]{0}', space=sflag, size = 0x4, scoped, tag = 'scoped memory for tpu_custom_call.1']
  #allocation7 [shape = 'u8[512]{0}', space=smem, size = 0x200, scoped, tag = 'prefetched SMEM operand 0']
  #allocation10 [shape = 's32[]', space=sflag, size = 0x4, offset = 0, fixed_abs, tag = 'sflag constant byte address 0x0 - dummy sync flag']
  %s0 = inlined_call_operand.vmem [shape: s32[16], index: 0, kind: input, shape index: {}]
  %s1 = inlined_call_operand.vmem [shape: f32[32,16], index: 1, kind: input, shape index: {}]
  %s2 = inlined_call_operand.vmem [shape: f32[1,16], index: 2, kind: input, shape index: {}]
  %s3 = inlined_call_operand.vmem [shape: bf16[128,16], index: 3, kind: input, shape index: {}]
  %s4 = inlined_call_operand.vmem [shape: f32[1,128], index: 4, kind: input, shape index: {}]
  %s5 = inlined_call_operand.hbm [shape: f32[16,128], index: 5, kind: output, shape index: {}]
  %s6 = sld [smem:[#allocation0]]
  $region67: #{tpu_custom_call.1} parent=0
    _
  %s8 = ssub.s32 1, %s6
  %s9 = scalar_select 0, %s8, %s6
  %s10 = sshll.u32 %s0, 4
  %s11 = int_to_ptr.vmem [resolvable:$true] %s10
  %13 = dma.vmem_to_smem %s11, 16, [#allocation7], [#allocation6]
  %14 = dma.done [#allocation6], 16
  %15 = sfence
  $region1: #{tpu_custom_call.1} parent=0
    #allocation8 [shape = 'u8[8192]{0}', space=vmem, size = 0x2000, scoped, tag = 'output window, operand 0, single buffered']
    #allocation9 [shape = 's32[1]{0}', space=sflag, size = 0x4, scoped, tag = 'scoped memory for tpu_custom_call.1']
    %16 = vsyncpa [#allocation9], 0
    // Predicated region
    $region2: #{tpu_custom_call.1} parent=1 // pred_check
      _
    $region3: #{tpu_custom_call.1} parent=1 // pred_check_branch
      %18 = sbr.rel (0) target = $region5
    $region4: #{tpu_custom_call.1} parent=1 // pred_region
      _
    $region5: #{tpu_custom_call.1} parent=1 // pred_fallthru
      _
    // Predicated region
    $region6: #{tpu_custom_call.1} parent=1 // pred_check
      _
    $region7: #{tpu_custom_call.1} parent=1 // pred_check_branch
      %20 = sbr.rel (0) target = $region9
    $region8: #{tpu_custom_call.1} parent=1 // pred_region
      _
    $region9: #{tpu_custom_call.1} parent=1 // pred_fallthru
      _
    // Predicated region
    $region10: #{tpu_custom_call.1} parent=1 // pred_check
      _
    $region11: #{tpu_custom_call.1} parent=1 // pred_check_branch
      %22 = sbr.rel (0) target = $region13
    $region12: #{tpu_custom_call.1} parent=1 // pred_region
      _
    $region13: #{tpu_custom_call.1} parent=1 // pred_fallthru
      _
    %p24 = scmp.eq.s32.totalorder 0, 0
    // Predicated region
    $region14: #{tpu_custom_call.1} parent=1 // pred_check
      %p25 = pneg %p24
    $region15: #{tpu_custom_call.1} parent=1 // pred_check_branch
      %27 = sbr.rel (%p25) target = $region17
    $region16: #{tpu_custom_call.1} parent=1 // pred_region
      %p29 = scmp.lt.u32.totalorder 32, 8
      %p30 = pneg %p29
      // Predicated region
      $region18: #{tpu_custom_call.1} parent=16 // pred_check
        _
      $region19: #{tpu_custom_call.1} parent=16 // pred_check_branch
        %32 = sbr.rel (%p29) target = $region21
      $region20: #{tpu_custom_call.1} parent=16 // pred_region
        %s48 = sand.u32 32, 7
        %p49 = scmp.eq.s32.totalorder %s48, 0
        // Predicated region
        $region33: #{tpu_custom_call.1} parent=20 // pred_check
          %p50 = pneg %p49
        $region34: #{tpu_custom_call.1} parent=20 // pred_check_branch
          %52 = sbr.rel (%p50) target = $region36
        $region35: #{tpu_custom_call.1} parent=20 // pred_region
          loop: start=0, step=1, limit=1
          $region37: #{tpu_custom_call.1} parent=35 // loop_pre_header
            _
          $region38: #{tpu_custom_call.1} parent=35 // loop_header
            %s54 = sphi 0, %s58
            %p55 = scmp.ge.s32.totalorder %s54, 1
            %s59 = sphi %s1, %s1
            %s60 = sphi [#allocation4], [#allocation4]
          $region39: #{tpu_custom_call.1} parent=35 // loop_header_branch
            %57 = sbr.rel (%p55) target = $region43
          $region40: #{tpu_custom_call.1} parent=35 // loop_body
            %v61 = vld [vmem:[%s59] sm:$0xff]
            %62 = vst [vmem:[%s60] sm:$0xff] %v61
            %v63 = vld [vmem:[%s59 + $0x8] sm:$0xff]
            %64 = vst [vmem:[%s60 + $0x8] sm:$0xff] %v63
            %v65 = vld [vmem:[%s59 + $0x10] sm:$0xff]
            %66 = vst [vmem:[%s60 + $0x10] sm:$0xff] %v65
            %v67 = vld [vmem:[%s59 + $0x18] sm:$0xff]
            %68 = vst [vmem:[%s60 + $0x18] sm:$0xff] %v67
          $region41: #{tpu_custom_call.1} parent=35 // loop_footer
            %s58 = sadd.s32 1, %s54
          $region42: #{tpu_custom_call.1} parent=35 // loop_footer_branch
            %53 = sbr.rel target = $region38
          $region43: #{tpu_custom_call.1} parent=35 // loop_exit
            _
        $region36: #{tpu_custom_call.1} parent=20 // pred_fallthru
          _
        %p69 = pneg %p49
        // Predicated region
        $region44: #{tpu_custom_call.1} parent=20 // pred_check
          _
        $region45: #{tpu_custom_call.1} parent=20 // pred_check_branch
          %71 = sbr.rel (%p49) target = $region47
        $region46: #{tpu_custom_call.1} parent=20 // pred_region
          %s72 = sand.u32 32, 7
        $region47: #{tpu_custom_call.1} parent=20 // pred_fallthru
          _
      $region21: #{tpu_custom_call.1} parent=16 // pred_fallthru
        _
      // Predicated region
      $region22: #{tpu_custom_call.1} parent=16 // pred_check
        %p33 = pneg %p29
      $region23: #{tpu_custom_call.1} parent=16 // pred_check_branch
        %35 = sbr.rel (%p33) target = $region25
      $region24: #{tpu_custom_call.1} parent=16 // pred_region
        %s36 = sshll.u32 1, 32
        %s37 = ssub.s32 %s36, 1
        loop: start=0, step=1, limit=1
        $region26: #{tpu_custom_call.1} parent=24 // loop_pre_header
          _
        $region27: #{tpu_custom_call.1} parent=24 // loop_header
          %s39 = sphi 0, %s43
          %p40 = scmp.ge.s32.totalorder %s39, 1
          %s44 = sphi %s1, %s1
          %s45 = sphi [#allocation4], [#allocation4]
        $region28: #{tpu_custom_call.1} parent=24 // loop_header_branch
          %42 = sbr.rel (%p40) target = $region32
        $region29: #{tpu_custom_call.1} parent=24 // loop_body
          %v46 = vld [vmem:[%s44] sm:%s37]
          %47 = vst [vmem:[%s45] sm:%s37] %v46
        $region30: #{tpu_custom_call.1} parent=24 // loop_footer
          %s43 = sadd.s32 1, %s39
        $region31: #{tpu_custom_call.1} parent=24 // loop_footer_branch
          %38 = sbr.rel target = $region27
        $region32: #{tpu_custom_call.1} parent=24 // loop_exit
          _
      $region25: #{tpu_custom_call.1} parent=16 // pred_fallthru
        _
      // Predicated region
      $region48: #{tpu_custom_call.1} parent=16 // pred_check
        _
      $region49: #{tpu_custom_call.1} parent=16 // pred_check_branch
        %75 = sbr.rel (0) target = $region51
      $region50: #{tpu_custom_call.1} parent=16 // pred_region
        %76 = vsyncadd [#allocation5], 512
      $region51: #{tpu_custom_call.1} parent=16 // pred_fallthru
        _
      %s77 = smul.u32 32, 1
      %s78 = sshll.u32 %s77, 4
      %79 = dma.done [#allocation5], %s78
      loop: start=0, step=1, limit=16
      $region52: #{tpu_custom_call.1} parent=16 // loop_pre_header
        _
      $region53: #{tpu_custom_call.1} parent=16 // loop_header
        %s81 = sphi 0, %s85
        %p82 = scmp.ge.s32.totalorder %s81, 16
      $region54: #{tpu_custom_call.1} parent=16 // loop_header_branch
        %84 = sbr.rel (%p82) target = $region58
      $region55: #{tpu_custom_call.1} parent=16 // loop_body
        %s86 = sld [smem:[#allocation7 + %s81]]
        %s87 = scalar_lea.vmem [#allocation4], %s86
        %v88 = vld [vmem:[%s87] sm:$0x1]
        %s89 = scalar_lea.vmem [#allocation2], %s81
        %vm90 = vcmask 122880
        %91 = vst.msk [vmem:[%s89] sm:$0x1] %vm90, %v88
      $region56: #{tpu_custom_call.1} parent=16 // loop_footer
        %s85 = sadd.s32 1, %s81
      $region57: #{tpu_custom_call.1} parent=16 // loop_footer_branch
        %80 = sbr.rel target = $region53
      $region58: #{tpu_custom_call.1} parent=16 // loop_exit
        _
      %v92 = vld [vmem:[#allocation2] sm:$0xff]
      %v93 = vld [vmem:[#allocation2 + $0x8] sm:$0xff]
      %v94 = vld [vmem:[%s2] sm:$0x1]
      %v96 = vlaneseq
      %v97 = vshrl.u32 %v96, 7
      %v98 = vsub.s32 0, %v97
      %v99 = vrot.slane %v94, %v98
      %v101 = vadd.f32 %v92, %v99
      %v102 = vadd.f32 %v93, %v99
      %v103 = vpack.c.bf16 %v102, %v101
      %v105 = vunpack.c.l.b16 %v103
      %v106 = vunpack.c.h.b16 %v103
      %v107 = vpack.c.b16 %v105, %v105
      %v108 = vpack.c.b16 %v106, %v106
      %vm111 = vcmask 125952
      %112 = vst.msk [vmem:[#allocation3] sm:$0xf] %vm111, %v107
      %113 = vst.msk [vmem:[#allocation3 + $0x4] sm:$0xf] %vm111, %v108
    $region17: #{tpu_custom_call.1} parent=1 // pred_fallthru
      _
    %v114 = vld [vmem:[#allocation3] sm:$0xf]
    %v115 = vld [vmem:[#allocation3 + $0x4] sm:$0xf]
    %v116 = vld [vmem:[%s3] sm:$0xf]
    %v117 = vld [vmem:[%s3 + $0x4] sm:$0xf]
    %v118 = vld [vmem:[%s3 + $0x8] sm:$0xf]
    %v119 = vld [vmem:[%s3 + $0xc] sm:$0xf]
    %v120 = vld [vmem:[%s3 + $0x10] sm:$0xf]
    %v121 = vld [vmem:[%s3 + $0x14] sm:$0xf]
    %v122 = vld [vmem:[%s3 + $0x18] sm:$0xf]
    %v123 = vld [vmem:[%s3 + $0x1c] sm:$0xf]
    %v124 = vld [vmem:[%s3 + $0x20] sm:$0xf]
    %v125 = vld [vmem:[%s3 + $0x24] sm:$0xf]
    %v126 = vld [vmem:[%s3 + $0x28] sm:$0xf]
    %v127 = vld [vmem:[%s3 + $0x2c] sm:$0xf]
    %v128 = vld [vmem:[%s3 + $0x30] sm:$0xf]
    %v129 = vld [vmem:[%s3 + $0x34] sm:$0xf]
    %v130 = vld [vmem:[%s3 + $0x38] sm:$0xf]
    %v131 = vld [vmem:[%s3 + $0x3c] sm:$0xf]
    %v132 = vld [vmem:[%s4] sm:$0x1]
    %v134 = vlaneseq
    %v135 = vshrl.u32 %v134, 7
    %v136 = vsub.s32 0, %v135
    %v137 = vrot.slane %v132, %v136
    %v141 = vunpack.c.l.b16 %v114
    %v142 = vunpack.c.l.b16 %v115
    %v143 = vpack.c.b16 %v142, %v141
    %v160 = vunpack.c.l.b16 %v116
    %v161 = vunpack.c.l.b16 %v117
    %v162 = vunpack.c.l.b16 %v118
    %v163 = vunpack.c.l.b16 %v119
    %v164 = vunpack.c.l.b16 %v120
    %v165 = vunpack.c.l.b16 %v121
    %v166 = vunpack.c.l.b16 %v122
    %v167 = vunpack.c.l.b16 %v123
    %v168 = vunpack.c.l.b16 %v124
    %v169 = vunpack.c.l.b16 %v125
    %v170 = vunpack.c.l.b16 %v126
    %v171 = vunpack.c.l.b16 %v127
    %v172 = vunpack.c.l.b16 %v128
    %v173 = vunpack.c.l.b16 %v129
    %v174 = vunpack.c.l.b16 %v130
    %v175 = vunpack.c.l.b16 %v131
    %v176 = vpack.c.b16 %v161, %v160
    %v177 = vpack.c.b16 %v163, %v162
    %v178 = vpack.c.b16 %v165, %v164
    %v179 = vpack.c.b16 %v167, %v166
    %v180 = vpack.c.b16 %v169, %v168
    %v181 = vpack.c.b16 %v171, %v170
    %v182 = vpack.c.b16 %v173, %v172
    %v183 = vpack.c.b16 %v175, %v174
    %vm184 = vcmask 130048
    %v186 = vsel %vm184, %v143, 0
    %v189 = vsel %vm184, %v176, 0
    %v192 = vsel %vm184, %v177, 0
    %v195 = vsel %vm184, %v178, 0
    %v198 = vsel %vm184, %v179, 0
    %v201 = vsel %vm184, %v180, 0
    %v204 = vsel %vm184, %v181, 0
    %v207 = vsel %vm184, %v182, 0
    %v210 = vsel %vm184, %v183, 0
    %212 = vmatprep.subr.bf16.mxu0 0
    %213 = vmatpush1.bf16.xpose.msra.mxu0 %v210
    %214 = vmatprep.subr.bf16.mxu0 0
    %215 = vmatpush1.bf16.xpose.msra.mxu0 %v207
    %216 = vmatprep.subr.bf16.mxu0 0
    %217 = vmatpush1.bf16.xpose.msra.mxu0 %v204
    %218 = vmatprep.subr.bf16.mxu0 0
    %219 = vmatpush1.bf16.xpose.msra.mxu0 %v201
    %220 = vmatprep.subr.bf16.mxu0 0
    %221 = vmatpush1.bf16.xpose.msra.mxu0 %v198
    %222 = vmatprep.subr.bf16.mxu0 0
    %223 = vmatpush1.bf16.xpose.msra.mxu0 %v195
    %224 = vmatprep.subr.bf16.mxu0 0
    %225 = vmatpush1.bf16.xpose.msra.mxu0 %v192
    %226 = vmatprep.subr.bf16.mxu0 0
    %227 = vmatpush1.bf16.xpose.msra.mxu0 %v189
    %228 = vmatprep.subr.bf16.mxu0 0
    %229 = vmatpush2.bf16.xpose.msra.mxu0 0
    %230 = vmatprep.subr.bf16.mxu0 0
    %231 = vmatpush2.bf16.xpose.msra.mxu0 0
    %232 = vmatprep.subr.bf16.mxu0 0
    %233 = vmatpush2.bf16.xpose.msra.mxu0 0
    %234 = vmatprep.subr.bf16.mxu0 0
    %235 = vmatpush2.bf16.xpose.msra.mxu0 0
    %236 = vmatprep.subr.bf16.mxu0 0
    %237 = vmatpush2.bf16.xpose.msra.mxu0 0
    %238 = vmatprep.subr.bf16.mxu0 0
    %239 = vmatpush2.bf16.xpose.msra.mxu0 0
    %240 = vmatprep.subr.bf16.mxu0 0
    %241 = vmatpush2.bf16.xpose.msra.mxu0 0
    %242 = vmatprep.subr.bf16.mxu0 0
    %243 = vmatpush2.bf16.xpose.msra.mxu0 0
    %244 = vmatprep.mubr.bf16.mxu0 0
    %245 = vmatmul.mubr.bf16.gmra.mxu0 %v186
    %v246 = vpop.f32.mrf.mxu0
    %v247 = vadd.f32 %v137, %v246
    %v248 = vpop.f32.mrf.mxu0
    %v249 = vpop.f32.mrf.mxu0
    %v250 = vadd.f32 %v137, %v249
    %v251 = vpop.f32.mrf.mxu0
    %252 = vdwg.mxu0
    %v253 = vmax.f32 %v247, %v250
    %v254 = vrot.slane %v253, 4
    %v255 = vmax.f32 %v253, %v254
    %v256 = vrot.slane %v255, 2
    %v257 = vmax.f32 %v255, %v256
    %v258 = vrot.slane %v257, 1
    %v259 = vmax.f32 %v257, %v258
    %v260 = vsub.f32 %v247, %v259
    %v261 = vsub.f32 %v250, %v259
    %v262 = vmul.f32 %v260, 1.442695
    %v263 = vpow.pop %v262
    %v264 = vmul.f32 %v261, 1.442695
    %v265 = vpow.pop %v264
    %v266 = vadd.f32 %v263, %v265
    %v267 = vrot.slane %v266, 4
    %v268 = vadd.f32 %v266, %v267
    %v269 = vrot.slane %v268, 2
    %v270 = vadd.f32 %v268, %v269
    %v271 = vrot.slane %v270, 1
    %v272 = vadd.f32 %v270, %v271
    %v273 = vlog2.pop %v272
    %v274 = vmul.f32 %v273, 0.6931472
    %v275 = vsub.f32 %v260, %v274
    %v276 = vsub.f32 %v261, %v274
    %277 = vst [vmem:[#allocation8] sm:$0xff] %v275
    %278 = vst [vmem:[#allocation8 + $0x8] sm:$0xff] %v276
    // Predicated region
    $region59: #{tpu_custom_call.1} parent=1 // pred_check
      _
    $region60: #{tpu_custom_call.1} parent=1 // pred_check_branch
      %280 = sbr.rel (0) target = $region62
    $region61: #{tpu_custom_call.1} parent=1 // pred_region
      %s282 = ssub.s32 256, 256
      %283 = vsyncadd [#allocation9], %s282
      %s284 = sshll.u32 [#allocation8], 4
      %s285 = int_to_ptr.vmem [resolvable:$true] %s284
      %290 = dma.vmem_to_hbm [thread:$0]  %s285, 256, %s5, [#allocation9], 128, 128, 8
    $region62: #{tpu_custom_call.1} parent=1 // pred_fallthru
      _
    // Predicated region
    $region63: #{tpu_custom_call.1} parent=1 // pred_check
      _
    $region64: #{tpu_custom_call.1} parent=1 // pred_check_branch
      %292 = sbr.rel (0) target = $region66
    $region65: #{tpu_custom_call.1} parent=1 // pred_region
      %293 = dma.done [#allocation9], 256
    $region66: #{tpu_custom_call.1} parent=1 // pred_fallthru
      _
    %294 = vsyncpa [#allocation9], 1
  %295 = vsyncmov [#allocation5]
  %s296 = vpop.sfrf %295
  %p297 = scmp.eq.s32.totalorder %s296, 0
  %p298 = pneg %p297
  %300 = shalt.err (%p298)

</llo_original>
